<compile_context>
chip_gen: v5e
topology: v5e:2x2
jax: 0.10.0
libtpu: 0.0.40
codegen_flags: <defaults>
</compile_context>

<pallas_src>
import functools

import jax
import jax.numpy as jnp
from jax.experimental import pallas as pl
from jax.experimental.pallas import tpu as pltpu

_N_CLS = 6
_N_BBOX = 36
_LANE = 128
_SUBLANE = 8
_VMEM_BUDGET_BYTES = 24 << 20  # tiling budget; actual limit set explicitly below


def _round_up(x, m):
    return ((x + m - 1) // m) * m


def _plan_tiles(n, dim_in, x_bytes):
    """Pick the row tile (multiple of 8) and an explicit scoped-VMEM limit."""
    # Resident weights/biases: lane-padded to 128 in VMEM, conservatively
    # counted as double-buffered even though their index_map is constant.
    resident = 2 * 2 * dim_in * _LANE * x_bytes + 2 * 2 * _SUBLANE * _LANE * 4
    # Per-row streaming cost: double-buffered x tile + two double-buffered
    # lane-padded output tiles.
    per_row = 2 * dim_in * x_bytes + 2 * 2 * _LANE * 4
    avail = max(_VMEM_BUDGET_BYTES - resident, _SUBLANE * per_row)
    tile = int(min(1024, avail // per_row, _round_up(n, _SUBLANE)))
    tile = max(_SUBLANE, (tile // _SUBLANE) * _SUBLANE)

    steps = -(-n // tile)
    # v7x has two TensorCores sharing 3.2 TB/s HBM: make sure mid/large row
    # counts give the "parallel" axis at least two steps, and balance blocks.
    if steps == 1 and n >= 512:
        steps = 2
    tile = max(_SUBLANE, _round_up(-(-n // steps), _SUBLANE))

    footprint = (resident
                 + 2 * tile * dim_in * x_bytes        # x double buffer
                 + 2 * 2 * tile * _LANE * 4)          # two lane-padded outputs
    # Explicit limit: >= footprint + headroom, never below the smallest
    # per-generation default (16 MiB on v5e), capped well under v7x's 64 MiB
    # physical VMEM.
    vmem_limit = int(min(max(footprint + (4 << 20), 16 << 20), 48 << 20))
    return tile, vmem_limit


def _fast_rcnn_kernel(x_ref, wc_ref, bc_ref, wb_ref, bb_ref, cls_ref, bbox_ref):
    # One row tile: (tile_n, dim_in) @ (dim_in, 6) and @ (dim_in, 36) on the
    # MXU, f32 accumulation, bias add on the VPU, direct narrow stores.
    x = x_ref[...]
    cls_ref[...] = (
        jnp.dot(x, wc_ref[...], preferred_element_type=jnp.float32)
        + bc_ref[...]
    ).astype(cls_ref.dtype)
    bbox_ref[...] = (
        jnp.dot(x, wb_ref[...], preferred_element_type=jnp.float32)
        + bb_ref[...]
    ).astype(bbox_ref.dtype)


@functools.partial(jax.jit, static_argnames=("use_bf16",))
def fast_rcnn_outputs_forward(x, w_cls, b_cls, w_bbox, b_bbox, use_bf16=False):
    """x: (N, dim_in) or (N, dim_in, 1, 1, 1).
    w_cls: (dim_in, 6), b_cls: (6,), w_bbox: (dim_in, 36), b_bbox: (36,).
    Returns (cls_score (N, 6), bbox_pred (N, 36)) in float32.

    use_bf16=True is an opt-in numerics change (bf16 inputs/weights on the
    MXU with f32 accumulation) that halves the dominant x HBM traffic.
    """
    if x.ndim == 5:
        # matches torch: x.squeeze(4).squeeze(3).squeeze(2)
        x = x.reshape(x.shape[0], x.shape[1])
    compute_dtype = jnp.bfloat16 if use_bf16 else jnp.float32
    x = x.astype(compute_dtype)
    w_cls = w_cls.astype(compute_dtype)
    w_bbox = w_bbox.astype(compute_dtype)
    b_cls = b_cls.astype(jnp.float32).reshape(1, _N_CLS)
    b_bbox = b_bbox.astype(jnp.float32).reshape(1, _N_BBOX)

    n, dim_in = x.shape
    x_bytes = jnp.dtype(compute_dtype).itemsize
    tile_n, vmem_limit = _plan_tiles(n, dim_in, x_bytes)
    grid = (pl.cdiv(n, tile_n),)  # ragged last block: OOB rows dropped on store

    cost = pl.CostEstimate(
        flops=2 * n * dim_in * (_N_CLS + _N_BBOX),
        transcendentals=0,
        bytes_accessed=(n * dim_in * x_bytes                       # x read
                        + dim_in * (_N_CLS + _N_BBOX) * x_bytes    # weights
                        + (_N_CLS + _N_BBOX) * 4                   # biases
                        + n * (_N_CLS + _N_BBOX) * 4),             # outputs
    )

    cls_score, bbox_pred = pl.pallas_call(
        _fast_rcnn_kernel,
        out_shape=(
            jax.ShapeDtypeStruct((n, _N_CLS), jnp.float32),
            jax.ShapeDtypeStruct((n, _N_BBOX), jnp.float32),
        ),
        grid_spec=pl.GridSpec(
            grid=grid,
            in_specs=[
                # x streamed tile-by-tile over N (double-buffered by Pallas).
                pl.BlockSpec((tile_n, dim_in), lambda i: (i, 0)),
                # weights / biases stay VMEM-resident across grid steps.
                pl.BlockSpec((dim_in, _N_CLS), lambda i: (0, 0)),
                pl.BlockSpec((1, _N_CLS), lambda i: (0, 0)),
                pl.BlockSpec((dim_in, _N_BBOX), lambda i: (0, 0)),
                pl.BlockSpec((1, _N_BBOX), lambda i: (0, 0)),
            ],
            out_specs=[
                pl.BlockSpec((tile_n, _N_CLS), lambda i: (i, 0)),
                pl.BlockSpec((tile_n, _N_BBOX), lambda i: (i, 0)),
            ],
        ),
        compiler_params=pltpu.CompilerParams(
            dimension_semantics=("parallel",),
            vmem_limit_bytes=vmem_limit,
        ),
        cost_estimate=cost,
    )(x, w_cls, b_cls, w_bbox, b_bbox)

    return cls_score, bbox_pred


def init_params(key, dim_in):
    """Deterministic synthetic init matching the torch _init_weights."""
    k_cls, k_bbox = jax.random.split(key)
    # torch Linear weight is (out, in); we store the transpose (in, out).
    w_cls = (0.01 * jax.random.normal(k_cls, (_N_CLS, dim_in), jnp.float32)).T
    b_cls = jnp.zeros((_N_CLS,), jnp.float32)
    w_bbox = (0.001 * jax.random.normal(
        k_bbox, (_N_BBOX, dim_in), jnp.float32)).T
    b_bbox = jnp.zeros((_N_BBOX,), jnp.float32)
    return w_cls, b_cls, w_bbox, b_bbox


if __name__ == "__main__":
    key = jax.random.PRNGKey(0)
    k_x, k_p = jax.random.split(key)

    N, DIM_IN = 8, 32
    # 5-D input (N, dim_in, 1, 1, 1), as the torch forward handles via squeeze
    x = jax.random.normal(k_x, (N, DIM_IN, 1, 1, 1), jnp.float32)
    w_cls, b_cls, w_bbox, b_bbox = init_params(k_p, DIM_IN)

    cls_score, bbox_pred = fast_rcnn_outputs_forward(
        x, w_cls, b_cls, w_bbox, b_bbox)
    jax.block_until_ready((cls_score, bbox_pred))

    # reference check in plain JAX
    x2 = x.reshape(N, DIM_IN)
    ref_cls = x2 @ w_cls + b_cls
    ref_bbox = x2 @ w_bbox + b_bbox
    assert cls_score.shape == (N, _N_CLS)
    assert bbox_pred.shape == (N, _N_BBOX)
    assert jnp.allclose(cls_score, ref_cls, atol=1e-5)
    assert jnp.allclose(bbox_pred, ref_bbox, atol=1e-5)

    # ragged-N case (N not a multiple of the row tile / sublane): exercises
    # the no-pad path where the last grid block's OOB rows are dropped.
    N2 = 13
    x_r = jax.random.normal(jax.random.PRNGKey(1), (N2, DIM_IN), jnp.float32)
    cls_r, bbox_r = fast_rcnn_outputs_forward(x_r, w_cls, b_cls, w_bbox, b_bbox)
    jax.block_until_ready((cls_r, bbox_r))
    assert cls_r.shape == (N2, _N_CLS) and bbox_r.shape == (N2, _N_BBOX)
    assert jnp.allclose(cls_r, x_r @ w_cls + b_cls, atol=1e-5)
    assert jnp.allclose(bbox_r, x_r @ w_bbox + b_bbox, atol=1e-5)

    print("KERNEL_OK")
</pallas_src>

<mosaic_0001>
module attributes {stable_mosaic.version = 11 : i64} {
  func.func @_fast_rcnn_kernel(%arg0: i32, %arg1: memref<8x32xf32, #tpu.memory_space<vmem>>, %arg2: memref<32x6xf32, #tpu.memory_space<vmem>>, %arg3: memref<1x6xf32, #tpu.memory_space<vmem>>, %arg4: memref<32x36xf32, #tpu.memory_space<vmem>>, %arg5: memref<1x36xf32, #tpu.memory_space<vmem>>, %arg6: memref<8x6xf32, #tpu.memory_space<vmem>>, %arg7: memref<8x36xf32, #tpu.memory_space<vmem>>) attributes {dimension_semantics = [#tpu.dimension_semantics<parallel>], iteration_bounds = array<i64: 1>, scalar_prefetch = 0 : i64, scratch_operands = 0 : i64, tpu.core_type = #tpu.core_type<tc>, window_params = [{transform_indices = @transform_0, window_bounds = array<i64: 8, 32>}, {pipeline_mode = #tpu.pipeline_mode<synchronous>, transform_indices = @transform_1, window_bounds = array<i64: 32, 6>}, {pipeline_mode = #tpu.pipeline_mode<synchronous>, transform_indices = @transform_2, window_bounds = array<i64: 1, 6>}, {pipeline_mode = #tpu.pipeline_mode<synchronous>, transform_indices = @transform_3, window_bounds = array<i64: 32, 36>}, {pipeline_mode = #tpu.pipeline_mode<synchronous>, transform_indices = @transform_4, window_bounds = array<i64: 1, 36>}, {transform_indices = @transform_5, window_bounds = array<i64: 8, 6>}, {transform_indices = @transform_6, window_bounds = array<i64: 8, 36>}]} {
    %c0 = arith.constant 0 : index
    %c0_0 = arith.constant 0 : index
    %0 = vector.load %arg1[%c0, %c0_0] : memref<8x32xf32, #tpu.memory_space<vmem>>, vector<8x32xf32>
    %c0_1 = arith.constant 0 : index
    %c0_2 = arith.constant 0 : index
    %1 = vector.load %arg2[%c0_1, %c0_2] : memref<32x6xf32, #tpu.memory_space<vmem>>, vector<32x6xf32>
    %cst = arith.constant dense<0.000000e+00> : vector<8x6xf32>
    %2 = tpu.matmul %0, %1, %cst {dimension_numbers = #tpu.dot_dimension_numbers<[1], [0], [0], [1], [0, 0, 1, 1], [], []>} : vector<8x32xf32>, vector<32x6xf32>, vector<8x6xf32> -> vector<8x6xf32>
    %c0_3 = arith.constant 0 : index
    %c0_4 = arith.constant 0 : index
    %3 = vector.load %arg3[%c0_3, %c0_4] : memref<1x6xf32, #tpu.memory_space<vmem>>, vector<1x6xf32>
    %4 = vector.broadcast %3 : vector<1x6xf32> to vector<8x6xf32>
    %5 = arith.addf %2, %4 : vector<8x6xf32>
    %c0_5 = arith.constant 0 : index
    %c0_6 = arith.constant 0 : index
    %6 = vector.load %arg6[%c0_5, %c0_6] : memref<8x6xf32, #tpu.memory_space<vmem>>, vector<8x6xf32>
    tpu.vector_store %arg6[%c0_5, %c0_6], %5 {strides = array<i32>} : memref<8x6xf32, #tpu.memory_space<vmem>>, vector<8x6xf32>,
    %c0_7 = arith.constant 0 : index
    %c0_8 = arith.constant 0 : index
    %7 = vector.load %arg4[%c0_7, %c0_8] : memref<32x36xf32, #tpu.memory_space<vmem>>, vector<32x36xf32>
    %cst_9 = arith.constant dense<0.000000e+00> : vector<8x36xf32>
    %8 = tpu.matmul %0, %7, %cst_9 {dimension_numbers = #tpu.dot_dimension_numbers<[1], [0], [0], [1], [0, 0, 1, 1], [], []>} : vector<8x32xf32>, vector<32x36xf32>, vector<8x36xf32> -> vector<8x36xf32>
    %c0_10 = arith.constant 0 : index
    %c0_11 = arith.constant 0 : index
    %9 = vector.load %arg5[%c0_10, %c0_11] : memref<1x36xf32, #tpu.memory_space<vmem>>, vector<1x36xf32>
    %10 = vector.broadcast %9 : vector<1x36xf32> to vector<8x36xf32>
    %11 = arith.addf %8, %10 : vector<8x36xf32>
    %c0_12 = arith.constant 0 : index
    %c0_13 = arith.constant 0 : index
    %12 = vector.load %arg7[%c0_12, %c0_13] : memref<8x36xf32, #tpu.memory_space<vmem>>, vector<8x36xf32>
    tpu.vector_store %arg7[%c0_12, %c0_13], %11 {strides = array<i32>} : memref<8x36xf32, #tpu.memory_space<vmem>>, vector<8x36xf32>,
    return
  }
  func.func @transform_0(%arg0: i32) -> (i32, i32) {
    %c0_i32 = arith.constant 0 : i32
    %c0_i32_0 = arith.constant 0 : i32
    return %arg0, %c0_i32 : i32, i32
  }
  func.func @transform_1(%arg0: i32) -> (i32, i32) {
    %c0_i32 = arith.constant 0 : i32
    %c0_i32_0 = arith.constant 0 : i32
    %c0_i32_1 = arith.constant 0 : i32
    return %c0_i32, %c0_i32_0 : i32, i32
  }
  func.func @transform_2(%arg0: i32) -> (i32, i32) {
    %c0_i32 = arith.constant 0 : i32
    %c0_i32_0 = arith.constant 0 : i32
    %c0_i32_1 = arith.constant 0 : i32
    return %c0_i32, %c0_i32_0 : i32, i32
  }
  func.func @transform_3(%arg0: i32) -> (i32, i32) {
    %c0_i32 = arith.constant 0 : i32
    %c0_i32_0 = arith.constant 0 : i32
    %c0_i32_1 = arith.constant 0 : i32
    return %c0_i32, %c0_i32_0 : i32, i32
  }
  func.func @transform_4(%arg0: i32) -> (i32, i32) {
    %c0_i32 = arith.constant 0 : i32
    %c0_i32_0 = arith.constant 0 : i32
    %c0_i32_1 = arith.constant 0 : i32
    return %c0_i32, %c0_i32_0 : i32, i32
  }
  func.func @transform_5(%arg0: i32) -> (i32, i32) {
    %c0_i32 = arith.constant 0 : i32
    %c0_i32_0 = arith.constant 0 : i32
    return %arg0, %c0_i32 : i32, i32
  }
  func.func @transform_6(%arg0: i32) -> (i32, i32) {
    %c0_i32 = arith.constant 0 : i32
    %c0_i32_0 = arith.constant 0 : i32
    return %arg0, %c0_i32 : i32, i32
  }
}

</mosaic_0001>

<llo_original>
// kernel: fast_rcnn_outputs_forward.1
$region0: #{fast_rcnn_outputs_forward.1}
  #allocation0 [shape = 'u32[]', space=smem, size = 0x4, offset = 0x4, fixed_abs, tag = 'smem constant byte address 0x4 - core index']
  #allocation1 [shape = 'u32[72,128]{1,0:T(1,128)}', space=vmem, size = 0x9000, scoped, tag = 'internal scratch']
  %s0 = inlined_call_operand.vmem [shape: f32[8,32], index: 0, kind: input, shape index: {}]
  %s1 = inlined_call_operand.vmem [shape: f32[32,6], index: 1, kind: input, shape index: {}]
  %s2 = inlined_call_operand.vmem [shape: f32[1,6], index: 2, kind: input, shape index: {}]
  %s3 = inlined_call_operand.vmem [shape: f32[32,36], index: 3, kind: input, shape index: {}]
  %s4 = inlined_call_operand.vmem [shape: f32[1,36], index: 4, kind: input, shape index: {}]
  %s5 = inlined_call_operand.hbm [shape: f32[8,6], index: 5, kind: output, shape index: {0}]
  %s6 = inlined_call_operand.hbm [shape: f32[8,36], index: 6, kind: output, shape index: {1}]
  %7 = xla_tuple %s5, %s6
  %s8 = sld [smem:[#allocation0]]
  $region38: #{fast_rcnn_outputs_forward.1} parent=0
    _
  %s10 = ssub.s32 1, %s8
  %s11 = scalar_select 0, %s10, %s8
  $region1: #{fast_rcnn_outputs_forward.1} parent=0
    #allocation2 [shape = 'u8[4096]{0}', space=vmem, size = 0x1000, scoped, tag = 'output window, operand 0, single buffered']
    #allocation3 [shape = 's32[1]{0}', space=sflag, size = 0x4, scoped, tag = 'scoped memory for fast_rcnn_outputs_forward.1']
    #allocation4 [shape = 'u8[4096]{0}', space=vmem, size = 0x1000, scoped, tag = 'output window, operand 1, single buffered']
    #allocation5 [shape = 's32[1]{0}', space=sflag, size = 0x4, scoped, tag = 'scoped memory for fast_rcnn_outputs_forward.1']
    %12 = vsyncpa [#allocation3], 0
    %13 = vsyncpa [#allocation5], 0
    // Predicated region
    $region2: #{fast_rcnn_outputs_forward.1} parent=1 // pred_check
      _
    $region3: #{fast_rcnn_outputs_forward.1} parent=1 // pred_check_branch
      %15 = sbr.rel (0) target = $region5
    $region4: #{fast_rcnn_outputs_forward.1} parent=1 // pred_region
      _
    $region5: #{fast_rcnn_outputs_forward.1} parent=1 // pred_fallthru
      _
    // Predicated region
    $region6: #{fast_rcnn_outputs_forward.1} parent=1 // pred_check
      _
    $region7: #{fast_rcnn_outputs_forward.1} parent=1 // pred_check_branch
      %17 = sbr.rel (0) target = $region9
    $region8: #{fast_rcnn_outputs_forward.1} parent=1 // pred_region
      _
    $region9: #{fast_rcnn_outputs_forward.1} parent=1 // pred_fallthru
      _
    // Predicated region
    $region10: #{fast_rcnn_outputs_forward.1} parent=1 // pred_check
      _
    $region11: #{fast_rcnn_outputs_forward.1} parent=1 // pred_check_branch
      %19 = sbr.rel (0) target = $region13
    $region12: #{fast_rcnn_outputs_forward.1} parent=1 // pred_region
      _
    $region13: #{fast_rcnn_outputs_forward.1} parent=1 // pred_fallthru
      _
    // Predicated region
    $region14: #{fast_rcnn_outputs_forward.1} parent=1 // pred_check
      _
    $region15: #{fast_rcnn_outputs_forward.1} parent=1 // pred_check_branch
      %21 = sbr.rel (0) target = $region17
    $region16: #{fast_rcnn_outputs_forward.1} parent=1 // pred_region
      _
    $region17: #{fast_rcnn_outputs_forward.1} parent=1 // pred_fallthru
      _
    // Predicated region
    $region18: #{fast_rcnn_outputs_forward.1} parent=1 // pred_check
      _
    $region19: #{fast_rcnn_outputs_forward.1} parent=1 // pred_check_branch
      %23 = sbr.rel (0) target = $region21
    $region20: #{fast_rcnn_outputs_forward.1} parent=1 // pred_region
      _
    $region21: #{fast_rcnn_outputs_forward.1} parent=1 // pred_fallthru
      _
    %v24 = vld [vmem:[%s0] sm:$0xff]
    %v25 = vld [vmem:[%s1] sm:$0xff]
    %v26 = vld [vmem:[%s1 + $0x8] sm:$0xff]
    %v27 = vld [vmem:[%s1 + $0x10] sm:$0xff]
    %v28 = vld [vmem:[%s1 + $0x18] sm:$0xff]
    %v29 = vld [vmem:[%s2] sm:$0x1]
    %v31 = vperm.slane %v29, 0
    %vm33 = vcmask 261120
    %v35 = vsel %vm33, %v24, 0
    %37 = vmatpush.msra.mxu0 0.0
    %38 = vmatpush.msra.mxu0 0.0
    %39 = vmatpush.msra.mxu0 0.0
    %40 = vmatpush.msra.mxu0 0.0
    %41 = vmatpush.msra.mxu0 0.0
    %42 = vmatpush.msra.mxu0 0.0
    %43 = vmatpush.msra.mxu0 0.0
    %44 = vmatpush.msra.mxu0 0.0
    %45 = vmatpush.msra.mxu0 0.0
    %46 = vmatpush.msra.mxu0 0.0
    %47 = vmatpush.msra.mxu0 0.0
    %48 = vmatpush.msra.mxu0 0.0
    %49 = vmatpush.msra.mxu0 %v28
    %50 = vmatpush.msra.mxu0 %v27
    %51 = vmatpush.msra.mxu0 %v26
    %52 = vmatpush.msra.mxu0 %v25
    %53 = vmatmul.f32.gmra.mxu0 %v35
    %v54 = vpop.f32.mrf.mxu0
    %v55 = vadd.f32 %v31, %v54
    %56 = vdwg.mxu0
    %vm57 = vcmask 48128
    %58 = vst.msk [vmem:[#allocation2] sm:$0xff] %vm57, %v55
    %v59 = vld [vmem:[%s3] sm:$0xff]
    %v60 = vld [vmem:[%s3 + $0x8] sm:$0xff]
    %v61 = vld [vmem:[%s3 + $0x10] sm:$0xff]
    %v62 = vld [vmem:[%s3 + $0x18] sm:$0xff]
    %v63 = vld [vmem:[%s4] sm:$0x1]
    %v65 = vperm.slane %v63, 0
    %67 = vmatpush.msra.mxu0 0.0
    %68 = vmatpush.msra.mxu0 0.0
    %69 = vmatpush.msra.mxu0 0.0
    %70 = vmatpush.msra.mxu0 0.0
    %71 = vmatpush.msra.mxu0 0.0
    %72 = vmatpush.msra.mxu0 0.0
    %73 = vmatpush.msra.mxu0 0.0
    %74 = vmatpush.msra.mxu0 0.0
    %75 = vmatpush.msra.mxu0 0.0
    %76 = vmatpush.msra.mxu0 0.0
    %77 = vmatpush.msra.mxu0 0.0
    %78 = vmatpush.msra.mxu0 0.0
    %79 = vmatpush.msra.mxu0 %v62
    %80 = vmatpush.msra.mxu0 %v61
    %81 = vmatpush.msra.mxu0 %v60
    %82 = vmatpush.msra.mxu0 %v59
    %83 = vmatmul.f32.gmra.mxu0 %v35
    %v84 = vpop.f32.mrf.mxu0
    %v85 = vadd.f32 %v65, %v84
    %86 = vdwg.mxu0
    %vm87 = vcmask 293888
    %88 = vst.msk [vmem:[#allocation4] sm:$0xff] %vm87, %v85
    // Predicated region
    $region22: #{fast_rcnn_outputs_forward.1} parent=1 // pred_check
      _
    $region23: #{fast_rcnn_outputs_forward.1} parent=1 // pred_check_branch
      %90 = sbr.rel (0) target = $region25
    $region24: #{fast_rcnn_outputs_forward.1} parent=1 // pred_region
      %92 = vsyncadd [#allocation3], 0
      %s94 = sshll.u32 [#allocation2], 4
      %s95 = int_to_ptr.vmem [resolvable:$true] %s94
      %s96 = sshll.u32 %s5, 4
      %s97 = int_to_ptr.hbm [resolvable:$true] %s96
      %99 = dma.vmem_to_hbm [thread:$0]  %s95, 128, %s97, [#allocation3]
    $region25: #{fast_rcnn_outputs_forward.1} parent=1 // pred_fallthru
      _
    // Predicated region
    $region26: #{fast_rcnn_outputs_forward.1} parent=1 // pred_check
      _
    $region27: #{fast_rcnn_outputs_forward.1} parent=1 // pred_check_branch
      %101 = sbr.rel (0) target = $region29
    $region28: #{fast_rcnn_outputs_forward.1} parent=1 // pred_region
      %103 = vsyncadd [#allocation5], 0
      %s105 = sshll.u32 [#allocation4], 4
      %s106 = int_to_ptr.vmem [resolvable:$true] %s105
      %s107 = sshll.u32 %s6, 4
      %s108 = int_to_ptr.hbm [resolvable:$true] %s107
      %110 = dma.vmem_to_hbm [thread:$0]  %s106, 128, %s108, [#allocation5]
    $region29: #{fast_rcnn_outputs_forward.1} parent=1 // pred_fallthru
      _
    // Predicated region
    $region30: #{fast_rcnn_outputs_forward.1} parent=1 // pred_check
      _
    $region31: #{fast_rcnn_outputs_forward.1} parent=1 // pred_check_branch
      %112 = sbr.rel (0) target = $region33
    $region32: #{fast_rcnn_outputs_forward.1} parent=1 // pred_region
      %114 = dma.done [#allocation3], 128
    $region33: #{fast_rcnn_outputs_forward.1} parent=1 // pred_fallthru
      _
    // Predicated region
    $region34: #{fast_rcnn_outputs_forward.1} parent=1 // pred_check
      _
    $region35: #{fast_rcnn_outputs_forward.1} parent=1 // pred_check_branch
      %116 = sbr.rel (0) target = $region37
    $region36: #{fast_rcnn_outputs_forward.1} parent=1 // pred_region
      %118 = dma.done [#allocation5], 128
    $region37: #{fast_rcnn_outputs_forward.1} parent=1 // pred_fallthru
      _
    %119 = vsyncpa [#allocation3], 1
    %120 = vsyncpa [#allocation5], 1

</llo_original>
